<compile_context>
chip_gen: v7x
topology: tpu7x:2x2x1
jax: 0.10.0
libtpu: 0.0.40
codegen_flags: <defaults>
</compile_context>

<pallas_src>
import math

import jax
import jax.numpy as jnp
from jax.experimental import pallas as pl
from jax.experimental.pallas import tpu as pltpu

_LANE = 128


# ----------------------------------------------------------------------------
# Kernel: elementwise nonlinearity (ReLU) on one (block_rows, cols) VMEM tile.
# ----------------------------------------------------------------------------
def _relu_kernel(x_ref, o_ref):
    x = x_ref[...]
    # Scalar zero operand: only vld / vmax / vst per block (no full-tile zero).
    o_ref[...] = jnp.maximum(x, jnp.zeros((), dtype=x.dtype))


def calc_gain():
    """Kaiming gain for ReLU (what the abstract calc_gain() would return)."""
    return math.sqrt(2.0)


def _sublane_tile(dtype):
    """Minimum sublane multiple for packed vreg tiles of this dtype."""
    itemsize = jnp.dtype(dtype).itemsize
    return {4: 8, 2: 16, 1: 32}.get(itemsize, 8)


def _choose_cols(n_elems, max_cols):
    """Largest multiple of 128 <= max_cols that divides n_elems (0 if none)."""
    c = min((max_cols // _LANE) * _LANE, (n_elems // _LANE) * _LANE)
    while c >= _LANE:
        if n_elems % c == 0:
            return c
        c -= _LANE
    return 0


def _chip_budgets():
    """(target block bytes, scoped VMEM limit) tuned per TPU generation.

    Live VMEM ~= 4 x block (double-buffered input + output), so:
      v5e/v6e (128 MiB physical VMEM): 8 MiB blocks under a 48 MiB limit.
      v7x     ( 64 MiB VMEM per TC) :  4 MiB blocks under a 32 MiB limit.
    Defaults are the conservative (v7x-safe) values if the query fails.
    """
    block_bytes, vmem_limit = 4 << 20, 32 << 20
    try:
        vmem = pltpu.get_tpu_info().vmem_capacity_bytes
        if vmem >= (128 << 20):
            block_bytes, vmem_limit = 8 << 20, 48 << 20
    except Exception:
        pass
    return block_bytes, vmem_limit


def _relu_pallas_2d(x2d, *, donate_input=False):
    """Run the streaming ReLU kernel on a (rows, cols) array, cols % 128 == 0."""
    rows, cols = x2d.shape
    dtype = x2d.dtype
    itemsize = jnp.dtype(dtype).itemsize
    sub = _sublane_tile(dtype)
    target_block_bytes, vmem_limit = _chip_budgets()

    # --- Dtype-aware, ~target_block_bytes, sublane-aligned blocks -----------
    rows_per_block = max(sub, target_block_bytes // (cols * itemsize))
    rows_per_block = (rows_per_block // sub) * sub

    if rows_per_block >= rows:
        # Whole tensor fits in one block.  Split into >= 2 grid steps when
        # legal so the "parallel" axis shards across both v7x TensorCores
        # (on v5e/v6e this is just a cheap 2-step serial loop).
        if rows >= 2 * sub:
            block_rows = ((pl.cdiv(rows, 2) + sub - 1) // sub) * sub
        else:
            block_rows = rows  # full row extent: always a legal block dim
    else:
        block_rows = rows_per_block

    num_blocks = pl.cdiv(rows, block_rows)
    # Best-effort even step count so the two v7x TensorCores stay balanced.
    if num_blocks > 1 and num_blocks % 2 == 1:
        half_target = pl.cdiv(rows, num_blocks + 1)
        for br in (
            ((half_target + sub - 1) // sub) * sub,  # aligned up
            (half_target // sub) * sub,              # aligned down
        ):
            if sub <= br < rows and pl.cdiv(rows, br) % 2 == 0:
                block_rows = br
                num_blocks = pl.cdiv(rows, br)
                break

    grid = (num_blocks,)

    cost = pl.CostEstimate(
        flops=rows * cols,
        transcendentals=0,
        bytes_accessed=2 * rows * cols * itemsize,
    )

    kwargs = {}
    if donate_input:
        # Write the result back into the input HBM buffer.  Callers should
        # donate x (jit donate_argnums) so XLA does not insert a copy.
        kwargs["input_output_aliases"] = {0: 0}

    return pl.pallas_call(
        _relu_kernel,
        out_shape=jax.ShapeDtypeStruct((rows, cols), dtype),
        grid_spec=pltpu.PrefetchScalarGridSpec(
            num_scalar_prefetch=0,
            grid=grid,
            in_specs=[pl.BlockSpec((block_rows, cols), lambda i: (i, 0))],
            out_specs=pl.BlockSpec((block_rows, cols), lambda i: (i, 0)),
        ),
        compiler_params=pltpu.CompilerParams(
            dimension_semantics=("parallel",),
            vmem_limit_bytes=vmem_limit,
        ),
        cost_estimate=cost,
        **kwargs,
    )(x2d)


def nonlinearity_forward(x, *, max_cols=2048, donate_input=False):
    """Apply the nonlinearity elementwise via a Pallas TPU kernel.

    x: jnp.ndarray of any shape (e.g. NCHW). Same shape/dtype returned.
    """
    orig_shape = x.shape
    dtype = x.dtype
    n = x.size
    if n == 0:
        return x
    x_flat = x.reshape(-1)

    # --- Common case: n has a multiple-of-128 divisor -> free 2-D view ------
    cols = _choose_cols(n, max_cols)
    if cols > 0:
        out2d = _relu_pallas_2d(
            x_flat.reshape(n // cols, cols), donate_input=donate_input
        )
        return out2d.reshape(orig_shape)

    # --- Ragged size: lane-aligned bulk through the kernel, tiny tail in JAX.
    bulk_n = (n // _LANE) * _LANE
    if bulk_n == 0:
        # Fewer than 128 elements: not worth a kernel launch.
        return jnp.maximum(x, jnp.zeros((), dtype=dtype))
    cols_b = _choose_cols(bulk_n, max_cols)
    bulk = _relu_pallas_2d(x_flat[:bulk_n].reshape(bulk_n // cols_b, cols_b))
    tail = jnp.maximum(x_flat[bulk_n:], jnp.zeros((), dtype=dtype))
    # TODO(synk): the concatenate costs one extra output copy; a manual-DMA
    #             masked last block would keep HBM traffic at the 2n minimum.
    return jnp.concatenate([bulk.reshape(-1), tail]).reshape(orig_shape)


if __name__ == "__main__":
    key = jax.random.PRNGKey(0)

    # Small NCHW input consistent with a conv-net nonlinearity block.
    x = jax.random.normal(key, (2, 4, 16, 16), dtype=jnp.float32)
    y = jax.block_until_ready(nonlinearity_forward(x))
    y_ref = jnp.maximum(x, 0.0)
    assert y.shape == x.shape and y.dtype == x.dtype
    assert bool(jnp.array_equal(y, y_ref))

    # Sub-32-bit dtype (16-row sublane packing rule for the block shape).
    xb = jax.random.normal(key, (2, 8, 16, 16), dtype=jnp.float32).astype(
        jnp.bfloat16
    )
    yb = jax.block_until_ready(nonlinearity_forward(xb))
    yb_ref = jnp.maximum(xb, jnp.bfloat16(0))
    assert yb.shape == xb.shape and yb.dtype == xb.dtype
    assert bool(jnp.array_equal(yb, yb_ref))

    # Ragged size (399 elements, not a multiple of 128): bulk + tail path.
    xr = jax.random.normal(key, (3, 7, 19), dtype=jnp.float32)
    yr = jax.block_until_ready(nonlinearity_forward(xr))
    assert yr.shape == xr.shape and yr.dtype == xr.dtype
    assert bool(jnp.array_equal(yr, jnp.maximum(xr, 0.0)))

    assert abs(calc_gain() - math.sqrt(2.0)) < 1e-12

    print("KERNEL_OK")
</pallas_src>

<mosaic_0001>
module attributes {stable_mosaic.version = 11 : i64} {
  func.func @_relu_kernel(%arg0: i32, %arg1: memref<1x2048xf32, #tpu.memory_space<vmem>>, %arg2: memref<1x2048xf32, #tpu.memory_space<vmem>>) attributes {dimension_semantics = [#tpu.dimension_semantics<parallel>], iteration_bounds = array<i64: 1>, scalar_prefetch = 0 : i64, scratch_operands = 0 : i64, tpu.core_type = #tpu.core_type<tc>, window_params = [{transform_indices = @transform_0, window_bounds = array<i64: 1, 2048>}, {transform_indices = @transform_1, window_bounds = array<i64: 1, 2048>}]} {
    %c0 = arith.constant 0 : index
    %c0_0 = arith.constant 0 : index
    %0 = vector.load %arg1[%c0, %c0_0] : memref<1x2048xf32, #tpu.memory_space<vmem>>, vector<1x2048xf32>
    %cst = arith.constant 0.000000e+00 : f32
    %1 = vector.broadcast %cst : f32 to vector<1x2048xf32>
    %2 = arith.maximumf %0, %1 : vector<1x2048xf32>
    %c0_1 = arith.constant 0 : index
    %c0_2 = arith.constant 0 : index
    %3 = vector.load %arg2[%c0_1, %c0_2] : memref<1x2048xf32, #tpu.memory_space<vmem>>, vector<1x2048xf32>
    tpu.vector_store %arg2[%c0_1, %c0_2], %2 {strides = array<i32>} : memref<1x2048xf32, #tpu.memory_space<vmem>>, vector<1x2048xf32>,
    return
  }
  func.func @transform_0(%arg0: i32) -> (i32, i32) {
    %c0_i32 = arith.constant 0 : i32
    %c0_i32_0 = arith.constant 0 : i32
    return %arg0, %c0_i32 : i32, i32
  }
  func.func @transform_1(%arg0: i32) -> (i32, i32) {
    %c0_i32 = arith.constant 0 : i32
    %c0_i32_0 = arith.constant 0 : i32
    return %arg0, %c0_i32 : i32, i32
  }
}

</mosaic_0001>

<llo_original>
// kernel: tpu_custom_call.1
$region0: #{tpu_custom_call.1}
  #allocation0 [shape = 'u32[]', space=smem, size = 0x4, offset = 0x4, fixed_abs, tag = 'smem constant byte address 0x4 - core index']
  #allocation1 [shape = 'u32[144,128]{1,0:T(1,128)}', space=vmem, size = 0x12000, scoped, tag = 'internal scratch']
  %s0 = inlined_call_operand.hbm [shape: f32[1,2048], index: 0, kind: input, shape index: {}]
  %s1 = inlined_call_operand.hbm [shape: f32[1,2048], index: 1, kind: output, shape index: {}]
  %s2 = sld [smem:[#allocation0]]
  $region18: #{tpu_custom_call.1} parent=0
    _
  %s4 = ssub.s32 1, %s2
  %s5 = scalar_select 0, %s4, %s2
  $region1: #{tpu_custom_call.1} parent=0
    #allocation2 [shape = 'u8[8192]{0}', space=vmem, size = 0x2000, scoped, tag = 'input window, operand 0, single buffered']
    #allocation3 [shape = 's32[1]{0}', space=sflag, size = 0x4, scoped, tag = 'scoped memory for tpu_custom_call.1']
    #allocation4 [shape = 's32[1]{0}', space=sflag, size = 0x4, scoped, tag = 'scoped memory for tpu_custom_call.1']
    #allocation5 [shape = 'u8[8192]{0}', space=vmem, size = 0x2000, scoped, tag = 'output window, operand 0, single buffered']
    %6 = vsyncpa [#allocation3], 0
    %7 = vsyncpa [#allocation4], 0
    // Predicated region
    $region2: #{tpu_custom_call.1} parent=1 // pred_check
      _
    $region3: #{tpu_custom_call.1} parent=1 // pred_check_branch
      %9 = sbr.rel (0) target = $region5
    $region4: #{tpu_custom_call.1} parent=1 // pred_region
      %s11 = ssub.s32 256, 256
      %12 = vsyncadd [#allocation3], %s11
      %s14 = sshll.u32 [#allocation2], 4
      %s15 = int_to_ptr.vmem [resolvable:$true] %s14
      %17 = dma.hbm_to_vmem [thread:$0]  %s0, 256, %s15, [#allocation3]
    $region5: #{tpu_custom_call.1} parent=1 // pred_fallthru
      _
    // Predicated region
    $region6: #{tpu_custom_call.1} parent=1 // pred_check
      _
    $region7: #{tpu_custom_call.1} parent=1 // pred_check_branch
      %19 = sbr.rel (0) target = $region9
    $region8: #{tpu_custom_call.1} parent=1 // pred_region
      %20 = dma.done [#allocation3], 256
    $region9: #{tpu_custom_call.1} parent=1 // pred_fallthru
      _
    %v21 = vld [vmem:[#allocation2] sm:$0xff]
    %v22 = vld [vmem:[#allocation2 + $0x8] sm:$0xff]
    %v23 = vmax.f32 %v21, 0.0
    %v24 = vmax.f32 %v22, 0.0
    %25 = vst [vmem:[#allocation5] sm:$0xff] %v23
    %26 = vst [vmem:[#allocation5 + $0x8] sm:$0xff] %v24
    // Predicated region
    $region10: #{tpu_custom_call.1} parent=1 // pred_check
      _
    $region11: #{tpu_custom_call.1} parent=1 // pred_check_branch
      %28 = sbr.rel (0) target = $region13
    $region12: #{tpu_custom_call.1} parent=1 // pred_region
      %s30 = ssub.s32 256, 256
      %31 = vsyncadd [#allocation4], %s30
      %s33 = sshll.u32 [#allocation5], 4
      %s34 = int_to_ptr.vmem [resolvable:$true] %s33
      %36 = dma.vmem_to_hbm [thread:$0]  %s34, 256, %s1, [#allocation4]
    $region13: #{tpu_custom_call.1} parent=1 // pred_fallthru
      _
    // Predicated region
    $region14: #{tpu_custom_call.1} parent=1 // pred_check
      _
    $region15: #{tpu_custom_call.1} parent=1 // pred_check_branch
      %38 = sbr.rel (0) target = $region17
    $region16: #{tpu_custom_call.1} parent=1 // pred_region
      %39 = dma.done [#allocation4], 256
    $region17: #{tpu_custom_call.1} parent=1 // pred_fallthru
      _
    %40 = vsyncpa [#allocation3], 1
    %41 = vsyncpa [#allocation4], 1

</llo_original>
